<compile_context>
chip_gen: v5e
topology: v5e:2x2
jax: 0.10.0
libtpu: 0.0.40
codegen_flags: <defaults>
</compile_context>

<pallas_src>
import jax
import jax.numpy as jnp
from jax.experimental import pallas as pl
from jax.experimental.pallas import tpu as pltpu


# -----------------------------------------------------------------------------
# Kernel: whole-tile elementwise sqrt (EUP/VPU) — purely HBM-bandwidth bound.
# -----------------------------------------------------------------------------
def _sqrt_kernel(x_ref, o_ref):
    o_ref[...] = jnp.sqrt(x_ref[...])


# Tile geometry / budgets.
_TARGET_BLOCK_BYTES = 8 * 1024 * 1024      # ~8 MiB per block (amortizes per-step overhead on v7x)
_VMEM_LIMIT_BYTES = 48 * 1024 * 1024       # in+out double-buffered 8 MiB blocks (~32 MiB) + headroom
_LANE_CANDIDATES = (2048, 1024, 512, 256, 128)   # lane-dense widths (multiples of 128)
_DEFAULT_LANE_W = 2048


def _row_align(itemsize: int) -> int:
    """Native sublane packing: 8 rows for 4-byte, 16 for 2-byte, 32 for 1-byte."""
    return 8 * max(1, 4 // itemsize)


def _choose_block_rows(rows: int, lane_w: int, itemsize: int) -> int:
    """Pick block row count: ~_TARGET_BLOCK_BYTES per block, dtype-aligned rows,
    and >= 2 grid steps whenever the array is big enough (v7x megacore)."""
    align = _row_align(itemsize)
    br = max(align, (_TARGET_BLOCK_BYTES // (lane_w * itemsize)) // align * align)
    if br >= rows and rows > align:
        half = -(-rows // 2)                      # cdiv(rows, 2)
        br = -(-half // align) * align            # round up to row alignment
    if br >= rows:
        br = rows                                 # single full-height block (always legal)
    return br


def _pallas_sqrt_2d(x2d: jax.Array) -> jax.Array:
    """sqrt over a (rows, lane_w) slab; ragged last row-block masked by Pallas."""
    rows, lane_w = x2d.shape
    br = _choose_block_rows(rows, lane_w, x2d.dtype.itemsize)
    grid = (pl.cdiv(rows, br),)
    return pl.pallas_call(
        _sqrt_kernel,
        out_shape=jax.ShapeDtypeStruct(x2d.shape, x2d.dtype),
        grid_spec=pltpu.PrefetchScalarGridSpec(
            num_scalar_prefetch=0,
            grid=grid,
            in_specs=[pl.BlockSpec((br, lane_w), lambda i: (i, 0))],
            out_specs=pl.BlockSpec((br, lane_w), lambda i: (i, 0)),
        ),
        compiler_params=pltpu.CompilerParams(
            # Parallel grid: shardable across v7x's two TensorCores.
            dimension_semantics=("parallel",),
            # Explicit scoped-VMEM budget: fits v5e/v6e (128 MiB physical) and
            # v7x (64 MiB physical) while allowing 8 MiB double-buffered blocks.
            vmem_limit_bytes=_VMEM_LIMIT_BYTES,
        ),
    )(x2d)


def _ragged_lane_width(shape, itemsize: int):
    """Largest trailing-dim product (free collapse) that still fits one aligned block."""
    max_w = _TARGET_BLOCK_BYTES // (_row_align(itemsize) * itemsize)
    best = None
    w = 1
    for d in reversed(shape):
        w *= int(d)
        if w <= max_w:
            best = w
        else:
            break
    return best


@jax.jit
def pallas_sqrt(x: jax.Array) -> jax.Array:
    """Elementwise sqrt matching torch.sqrt semantics (NaN for x < 0)."""
    orig_shape = x.shape
    n = x.size
    itemsize = jnp.dtype(x.dtype).itemsize

    # Truly tiny inputs: not worth a kernel launch.
    if n < 128:
        return jnp.sqrt(x)

    # Fast path: element count divisible by a lane-dense width -> free flatten
    # to 2-D, zero extra copies, ragged row count handled in-kernel by masking.
    for w in _LANE_CANDIDATES:
        if n % w == 0:
            return _pallas_sqrt_2d(x.reshape(n // w, w)).reshape(orig_shape)

    # Ragged path (n not a multiple of 128): collapse trailing dims into the
    # lane axis — still a free reshape, so traffic stays at 1 read + 1 write.
    # The last (partial) lane-tile per row is masked by the hardware layout.
    w = _ragged_lane_width(orig_shape, itemsize)
    if w is not None and w >= 128:
        return _pallas_sqrt_2d(x.reshape(n // w, w)).reshape(orig_shape)

    # Last resort (e.g. huge odd last dimension): Pallas on the aligned prefix,
    # tiny (< _DEFAULT_LANE_W elements) tail via jnp.sqrt.  Rare path.
    # TODO(synk): could avoid the prefix-slice copy with a manual-DMA 1-D kernel.
    x_flat = x.reshape(-1)
    rows = n // _DEFAULT_LANE_W
    if rows == 0:
        return jnp.sqrt(x)
    n_main = rows * _DEFAULT_LANE_W
    y_main = _pallas_sqrt_2d(
        x_flat[:n_main].reshape(rows, _DEFAULT_LANE_W)).reshape(-1)
    y_tail = jnp.sqrt(x_flat[n_main:])
    return jnp.concatenate([y_main, y_tail]).reshape(orig_shape)


if __name__ == "__main__":
    key = jax.random.PRNGKey(0)
    k1, k2, k3, k4 = jax.random.split(key, 4)

    # 1) Module-spec small NCHW input (2,4,16,16): fast path (1 grid step).
    #    Includes negative values to check torch.sqrt's NaN semantics.
    x_small = jax.random.uniform(
        k1, (2, 4, 16, 16), dtype=jnp.float32, minval=-0.5, maxval=10.0)
    y_small = pallas_sqrt(x_small)
    jax.block_until_ready(y_small)
    assert y_small.shape == x_small.shape and y_small.dtype == x_small.dtype
    assert jnp.allclose(y_small, jnp.sqrt(x_small),
                        rtol=1e-6, atol=1e-6, equal_nan=True)

    # 2) Larger aligned input: fast path, 8 MiB blocks, 2 grid steps.
    x_big = jax.random.uniform(
        k2, (8, 8, 256, 256), dtype=jnp.float32, minval=0.0, maxval=10.0)
    y_big = pallas_sqrt(x_big)
    jax.block_until_ready(y_big)
    assert y_big.shape == x_big.shape and y_big.dtype == x_big.dtype
    assert jnp.allclose(y_big, jnp.sqrt(x_big), rtol=1e-6, atol=1e-6)

    # 3) Odd element count (not a multiple of 128): ragged collapse path,
    #    lane dim = 231*257, masked partial row-block — no extra copies.
    x_odd = jax.random.uniform(
        k3, (3, 5, 231, 257), dtype=jnp.float32, minval=0.0, maxval=10.0)
    y_odd = pallas_sqrt(x_odd)
    jax.block_until_ready(y_odd)
    assert y_odd.shape == x_odd.shape and y_odd.dtype == x_odd.dtype
    assert jnp.allclose(y_odd, jnp.sqrt(x_odd), rtol=1e-6, atol=1e-6)

    # 4) bf16 input: dtype-dependent block rows keep ~constant bytes per step.
    x_bf16 = jax.random.uniform(
        k4, (8, 8, 256, 256), dtype=jnp.bfloat16, minval=0.0, maxval=10.0)
    y_bf16 = pallas_sqrt(x_bf16)
    jax.block_until_ready(y_bf16)
    assert y_bf16.shape == x_bf16.shape and y_bf16.dtype == x_bf16.dtype
    assert jnp.allclose(
        y_bf16.astype(jnp.float32), jnp.sqrt(x_bf16).astype(jnp.float32),
        rtol=1e-2, atol=1e-2)

    print("KERNEL_OK")
</pallas_src>

<mosaic_0001>
module attributes {stable_mosaic.version = 11 : i64} {
  func.func @_sqrt_kernel(%arg0: i32, %arg1: memref<1x2048xf32, #tpu.memory_space<vmem>>, %arg2: memref<1x2048xf32, #tpu.memory_space<vmem>>) attributes {dimension_semantics = [#tpu.dimension_semantics<parallel>], iteration_bounds = array<i64: 1>, scalar_prefetch = 0 : i64, scratch_operands = 0 : i64, tpu.core_type = #tpu.core_type<tc>, window_params = [{transform_indices = @transform_0, window_bounds = array<i64: 1, 2048>}, {transform_indices = @transform_1, window_bounds = array<i64: 1, 2048>}]} {
    %c0 = arith.constant 0 : index
    %c0_0 = arith.constant 0 : index
    %0 = vector.load %arg1[%c0, %c0_0] : memref<1x2048xf32, #tpu.memory_space<vmem>>, vector<1x2048xf32>
    %1 = math.sqrt %0 : vector<1x2048xf32>
    %c0_1 = arith.constant 0 : index
    %c0_2 = arith.constant 0 : index
    %2 = vector.load %arg2[%c0_1, %c0_2] : memref<1x2048xf32, #tpu.memory_space<vmem>>, vector<1x2048xf32>
    tpu.vector_store %arg2[%c0_1, %c0_2], %1 {strides = array<i32>} : memref<1x2048xf32, #tpu.memory_space<vmem>>, vector<1x2048xf32>,
    return
  }
  func.func @transform_0(%arg0: i32) -> (i32, i32) {
    %c0_i32 = arith.constant 0 : i32
    %c0_i32_0 = arith.constant 0 : i32
    return %arg0, %c0_i32 : i32, i32
  }
  func.func @transform_1(%arg0: i32) -> (i32, i32) {
    %c0_i32 = arith.constant 0 : i32
    %c0_i32_0 = arith.constant 0 : i32
    return %arg0, %c0_i32 : i32, i32
  }
}

</mosaic_0001>

<llo_original>
// kernel: pallas_sqrt.1
$region0: #{pallas_sqrt.1}
  #allocation0 [shape = 'u32[]', space=smem, size = 0x4, offset = 0x4, fixed_abs, tag = 'smem constant byte address 0x4 - core index']
  #allocation1 [shape = 'u32[72,128]{1,0:T(1,128)}', space=vmem, size = 0x9000, scoped, tag = 'internal scratch']
  %s0 = inlined_call_operand.vmem [shape: f32[1,2048], index: 0, kind: input, shape index: {}]
  %s1 = inlined_call_operand.vmem [shape: f32[1,2048], index: 1, kind: output, shape index: {}]
  %s2 = sld [smem:[#allocation0]]
  $region14: #{pallas_sqrt.1} parent=0
    _
  %s4 = ssub.s32 1, %s2
  %s5 = scalar_select 0, %s4, %s2
  // Predicated region
  $region2: #{pallas_sqrt.1} parent=0 // pred_check
    _
  $region3: #{pallas_sqrt.1} parent=0 // pred_check_branch
    %7 = sbr.rel (0) target = $region5
  $region4: #{pallas_sqrt.1} parent=0 // pred_region
    _
  $region5: #{pallas_sqrt.1} parent=0 // pred_fallthru
    _
  %v8 = vld [vmem:[%s0] sm:$0xff]
  %v9 = vld [vmem:[%s0 + $0x8] sm:$0xff]
  %v10 = vrsqrt.pop %v8
  %v11 = vmul.f32 %v10, %v8
  %v12 = vmul.f32 %v11, %v10
  %v13 = vmul.f32 0.5, %v12
  %v14 = vsub.f32 1.5, %v13
  %v15 = vmul.f32 %v10, %v14
  %v16 = vmul.f32 %v8, %v15
  %vm17 = vcmp.eq.f32.partialorder %v8, inf
  %v18 = vsel %vm17, %v8, %v16
  %vm19 = vcmp.eq.f32.partialorder %v8, 0.0
  %v20 = vand.u32 %v8, 2147483648
  %v21 = vsel %vm19, %v20, %v18
  %v22 = vrsqrt.pop %v9
  %v23 = vmul.f32 %v22, %v9
  %v24 = vmul.f32 %v23, %v22
  %v25 = vmul.f32 0.5, %v24
  %v26 = vsub.f32 1.5, %v25
  %v27 = vmul.f32 %v22, %v26
  %v28 = vmul.f32 %v9, %v27
  %vm29 = vcmp.eq.f32.partialorder %v9, inf
  %v30 = vsel %vm29, %v9, %v28
  %vm31 = vcmp.eq.f32.partialorder %v9, 0.0
  %v32 = vand.u32 %v9, 2147483648
  %v33 = vsel %vm31, %v32, %v30
  %34 = vst [vmem:[%s1] sm:$0xff] %v21
  %35 = vst [vmem:[%s1 + $0x8] sm:$0xff] %v33
  // Predicated region
  $region6: #{pallas_sqrt.1} parent=0 // pred_check
    _
  $region7: #{pallas_sqrt.1} parent=0 // pred_check_branch
    %37 = sbr.rel (0) target = $region9
  $region8: #{pallas_sqrt.1} parent=0 // pred_region
    _
  $region9: #{pallas_sqrt.1} parent=0 // pred_fallthru
    _
  // Predicated region
  $region10: #{pallas_sqrt.1} parent=0 // pred_check
    _
  $region11: #{pallas_sqrt.1} parent=0 // pred_check_branch
    %39 = sbr.rel (0) target = $region13
  $region12: #{pallas_sqrt.1} parent=0 // pred_region
    _
  $region13: #{pallas_sqrt.1} parent=0 // pred_fallthru
    _

</llo_original>
